<compile_context>
chip_gen: v7x
topology: tpu7x:2x2x1
jax: 0.10.0
libtpu: 0.0.40
codegen_flags: <defaults>
</compile_context>

<pallas_src>
import numpy as np
import jax
import jax.numpy as jnp
from jax.experimental import pallas as pl
from jax.experimental.pallas import tpu as pltpu

EPS = 1e-5


def conv_block_forward(x_nchw, weight, bias, gamma, beta):
    """x_nchw: (N, Cin, H, W); weight: (Cout, Cin, 3, 3); bias/gamma/beta: (Cout,)."""
    del bias  # conv bias cancels exactly under training-mode (batch-stat) BN
    N, Cin, H, W = x_nchw.shape
    Cout = weight.shape[0]
    WC_in, WC_out = W * Cin, W * Cout
    cnt = float(N * H * W)

    # ---- host-side layout glue (cheap XLA ops) -----------------------------
    # NCHW -> NHWC -> (N, H, W*Cin) lane-dense rows; pad H only (2 halo rows).
    x_rows = jnp.transpose(x_nchw, (0, 2, 3, 1)).astype(jnp.float32)
    x_rows = x_rows.reshape(N, H, WC_in)
    x_rows = jnp.pad(x_rows, ((0, 0), (1, 1), (0, 0)))              # (N, H+2, W*Cin)

    # Banded ("Toeplitz") weights: band[dy, win*Cin+cin, w*Cout+cout] =
    # weight[cout, cin, dy, dx] with win = w + dx - 1 (W padding folded in).
    w_hw = jnp.transpose(weight.astype(jnp.float32), (2, 3, 1, 0))  # (3,3,Cin,Cout)
    T = np.zeros((3, W, W), np.float32)
    for dx in range(3):
        for w in range(W):
            wi = w + dx - 1
            if 0 <= wi < W:
                T[dx, w, wi] = 1.0
    band = jnp.einsum("dwp,zdio->zpiwo", jnp.asarray(T), w_hw)
    band = band.reshape(3, WC_in, WC_out)

    # Per-channel BN params tiled across w -> lane-dense (1, W*Cout) rows.
    gamma_row = jnp.tile(gamma.astype(jnp.float32), W).reshape(1, WC_out)
    beta_row = jnp.tile(beta.astype(jnp.float32), W).reshape(1, WC_out)

    # 0/1 channel-sum matrix: one MXU op reduces stats over the w lane groups
    # per channel and re-broadcasts the result across all w positions.
    idx = np.arange(WC_out)
    chan_sum = jnp.asarray(
        (idx[:, None] % Cout == idx[None, :] % Cout).astype(np.float32))

    def kernel(x_ref, band_ref, gamma_ref, beta_ref, chan_ref, out_ref):
        # x_ref    : (N, H+2, W*Cin)     halo-padded, lane-dense (w, cin)
        # band_ref : (3, W*Cin, W*Cout)  banded conv weights, one slab per dy
        # gamma/beta_ref : (1, W*Cout)   per-channel, tiled across w
        # chan_ref : (W*Cout, W*Cout)    0/1 channel-sum matrix
        # out_ref  : (N, H, W*Cout)      lane-dense output (conv stashed here first)
        band_ = band_ref[...]
        s = jnp.zeros((1, WC_out), jnp.float32)
        ss = jnp.zeros((1, WC_out), jnp.float32)
        for n in range(N):                      # static loop: tiny batch, VMEM-resident
            x = x_ref[n]                        # (H+2, W*Cin)
            acc = jnp.zeros((H, WC_out), jnp.float32)
            for dy in range(3):                 # 3 matmuls = entire 3x3xCin conv
                acc = acc + jnp.dot(x[dy:dy + H, :], band_[dy],
                                    preferred_element_type=jnp.float32)
            out_ref[n] = acc                    # stash conv in the output block (VMEM)
            s = s + jnp.sum(acc, axis=0, keepdims=True)
            ss = ss + jnp.sum(acc * acc, axis=0, keepdims=True)

        # Per-channel reduction over w via a single 0/1 matmul (stays lane-dense).
        stats = jnp.concatenate([s, ss], axis=0)                     # (2, W*Cout)
        red = jnp.dot(stats, chan_ref[...], preferred_element_type=jnp.float32)
        mean = red[0:1] * (1.0 / cnt)
        var = red[1:2] * (1.0 / cnt) - mean * mean                   # biased (train) var
        scale = gamma_ref[...] * jax.lax.rsqrt(var + EPS)
        shift = beta_ref[...] - mean * scale

        for n in range(N):                      # fused BN affine (one FMA) + ReLU
            out_ref[n] = jnp.maximum(out_ref[n] * scale + shift, 0.0)

    out_rows = pl.pallas_call(
        kernel,
        out_shape=jax.ShapeDtypeStruct((N, H, WC_out), jnp.float32),
        grid=(1,),
        in_specs=[pl.BlockSpec((N, H + 2, WC_in), lambda i: (0, 0, 0)),
                  pl.BlockSpec((3, WC_in, WC_out), lambda i: (0, 0, 0)),
                  pl.BlockSpec((1, WC_out), lambda i: (0, 0)),
                  pl.BlockSpec((1, WC_out), lambda i: (0, 0)),
                  pl.BlockSpec((WC_out, WC_out), lambda i: (0, 0))],
        out_specs=pl.BlockSpec((N, H, WC_out), lambda i: (0, 0, 0)),
        compiler_params=pltpu.CompilerParams(
            dimension_semantics=("arbitrary",),
            vmem_limit_bytes=32 * 1024 * 1024),
    )(x_rows, band, gamma_row, beta_row, chan_sum)

    # PyTorch-facing NCHW output (a fused consumer could take the lane-dense
    # (N, H, W*Cout) slab directly and skip this transpose).
    return jnp.transpose(out_rows.reshape(N, H, W, Cout), (0, 3, 1, 2))


def conv_block_reference(x_nchw, weight, bias, gamma, beta):
    """Pure-JAX reference (lax conv + batch-stat BN + ReLU) for verification."""
    conv = jax.lax.conv_general_dilated(
        x_nchw.astype(jnp.float32), weight.astype(jnp.float32),
        window_strides=(1, 1), padding=((1, 1), (1, 1)),
        dimension_numbers=("NCHW", "OIHW", "NCHW"),
    ) + bias.reshape(1, -1, 1, 1)
    mean = jnp.mean(conv, axis=(0, 2, 3), keepdims=True)
    var = jnp.mean((conv - mean) ** 2, axis=(0, 2, 3), keepdims=True)
    y = (conv - mean) * jax.lax.rsqrt(var + EPS)
    y = y * gamma.reshape(1, -1, 1, 1) + beta.reshape(1, -1, 1, 1)
    return jnp.maximum(y, 0.0)


if __name__ == "__main__":
    # Small shapes consistent with the module: batch=2, in_c=4, out_c=8, 16x16.
    N, Cin, Cout, H, W = 2, 4, 8, 16, 16

    key = jax.random.PRNGKey(0)
    kx, kw, kb, kg, kbe = jax.random.split(key, 5)

    x = jax.random.normal(kx, (N, Cin, H, W), dtype=jnp.float32)

    # Deterministic parameter init (Conv2d(in_c, out_c, 3) + BatchNorm2d(out_c)).
    fan_in = Cin * 3 * 3
    bound = 1.0 / jnp.sqrt(fan_in)
    weight = jax.random.uniform(kw, (Cout, Cin, 3, 3), jnp.float32, -bound, bound)
    bias = jax.random.uniform(kb, (Cout,), jnp.float32, -bound, bound)
    # Non-trivial gamma/beta to exercise the fused BN affine path.
    gamma = 1.0 + 0.1 * jax.random.normal(kg, (Cout,), jnp.float32)
    beta = 0.1 * jax.random.normal(kbe, (Cout,), jnp.float32)

    out = conv_block_forward(x, weight, bias, gamma, beta)
    out = jax.block_until_ready(out)

    ref = jax.block_until_ready(conv_block_reference(x, weight, bias, gamma, beta))
    assert out.shape == (N, Cout, H, W)
    assert jnp.allclose(out, ref, atol=1e-4, rtol=1e-4)

    print("KERNEL_OK")
</pallas_src>

<mosaic_0001>
module attributes {stable_mosaic.version = 11 : i64} {
  func.func @kernel(%arg0: i32, %arg1: memref<2x18x64xf32, #tpu.memory_space<vmem>>, %arg2: memref<3x64x128xf32, #tpu.memory_space<vmem>>, %arg3: memref<1x128xf32, #tpu.memory_space<vmem>>, %arg4: memref<1x128xf32, #tpu.memory_space<vmem>>, %arg5: memref<128x128xf32, #tpu.memory_space<vmem>>, %arg6: memref<2x16x128xf32, #tpu.memory_space<vmem>>) attributes {dimension_semantics = [#tpu.dimension_semantics<arbitrary>], iteration_bounds = array<i64: 1>, scalar_prefetch = 0 : i64, scratch_operands = 0 : i64, tpu.core_type = #tpu.core_type<tc>, window_params = [{pipeline_mode = #tpu.pipeline_mode<synchronous>, transform_indices = @transform_0, window_bounds = array<i64: 2, 18, 64>}, {pipeline_mode = #tpu.pipeline_mode<synchronous>, transform_indices = @transform_1, window_bounds = array<i64: 3, 64, 128>}, {pipeline_mode = #tpu.pipeline_mode<synchronous>, transform_indices = @transform_2, window_bounds = array<i64: 1, 128>}, {pipeline_mode = #tpu.pipeline_mode<synchronous>, transform_indices = @transform_3, window_bounds = array<i64: 1, 128>}, {pipeline_mode = #tpu.pipeline_mode<synchronous>, transform_indices = @transform_4, window_bounds = array<i64: 128, 128>}, {pipeline_mode = #tpu.pipeline_mode<synchronous>, transform_indices = @transform_5, window_bounds = array<i64: 2, 16, 128>}]} {
    %c0 = arith.constant 0 : index
    %c0_0 = arith.constant 0 : index
    %c0_1 = arith.constant 0 : index
    %0 = vector.load %arg2[%c0, %c0_0, %c0_1] : memref<3x64x128xf32, #tpu.memory_space<vmem>>, vector<3x64x128xf32>
    %cst = arith.constant 0.000000e+00 : f32
    %1 = vector.broadcast %cst : f32 to vector<1x128xf32>
    %cst_2 = arith.constant 0.000000e+00 : f32
    %2 = vector.broadcast %cst_2 : f32 to vector<1x128xf32>
    %c0_3 = arith.constant 0 : index
    %c0_4 = arith.constant 0 : index
    %c0_5 = arith.constant 0 : index
    %3 = vector.load %arg1[%c0_3, %c0_4, %c0_5] : memref<2x18x64xf32, #tpu.memory_space<vmem>>, vector<1x18x64xf32>
    %4 = vector.shape_cast %3 : vector<1x18x64xf32> to vector<18x64xf32>
    %cst_6 = arith.constant 0.000000e+00 : f32
    %5 = vector.broadcast %cst_6 : f32 to vector<16x128xf32>
    %6 = vector.extract_strided_slice %4 {offsets = [0, 0], sizes = [16, 64], strides = [1, 1]} : vector<18x64xf32> to vector<16x64xf32>
    %7 = vector.extract_strided_slice %0 {offsets = [0, 0, 0], sizes = [1, 64, 128], strides = [1, 1, 1]} : vector<3x64x128xf32> to vector<1x64x128xf32>
    %8 = vector.shape_cast %7 : vector<1x64x128xf32> to vector<64x128xf32>
    %cst_7 = arith.constant dense<0.000000e+00> : vector<16x128xf32>
    %9 = tpu.matmul %6, %8, %cst_7 {dimension_numbers = #tpu.dot_dimension_numbers<[1], [0], [0], [1], [0, 0, 1, 1], [], []>} : vector<16x64xf32>, vector<64x128xf32>, vector<16x128xf32> -> vector<16x128xf32>
    %10 = arith.addf %5, %9 : vector<16x128xf32>
    %11 = vector.extract_strided_slice %4 {offsets = [1, 0], sizes = [16, 64], strides = [1, 1]} : vector<18x64xf32> to vector<16x64xf32>
    %12 = vector.extract_strided_slice %0 {offsets = [1, 0, 0], sizes = [1, 64, 128], strides = [1, 1, 1]} : vector<3x64x128xf32> to vector<1x64x128xf32>
    %13 = vector.shape_cast %12 : vector<1x64x128xf32> to vector<64x128xf32>
    %cst_8 = arith.constant dense<0.000000e+00> : vector<16x128xf32>
    %14 = tpu.matmul %11, %13, %cst_8 {dimension_numbers = #tpu.dot_dimension_numbers<[1], [0], [0], [1], [0, 0, 1, 1], [], []>} : vector<16x64xf32>, vector<64x128xf32>, vector<16x128xf32> -> vector<16x128xf32>
    %15 = arith.addf %10, %14 : vector<16x128xf32>
    %16 = vector.extract_strided_slice %4 {offsets = [2, 0], sizes = [16, 64], strides = [1, 1]} : vector<18x64xf32> to vector<16x64xf32>
    %17 = vector.extract_strided_slice %0 {offsets = [2, 0, 0], sizes = [1, 64, 128], strides = [1, 1, 1]} : vector<3x64x128xf32> to vector<1x64x128xf32>
    %18 = vector.shape_cast %17 : vector<1x64x128xf32> to vector<64x128xf32>
    %cst_9 = arith.constant dense<0.000000e+00> : vector<16x128xf32>
    %19 = tpu.matmul %16, %18, %cst_9 {dimension_numbers = #tpu.dot_dimension_numbers<[1], [0], [0], [1], [0, 0, 1, 1], [], []>} : vector<16x64xf32>, vector<64x128xf32>, vector<16x128xf32> -> vector<16x128xf32>
    %20 = arith.addf %15, %19 : vector<16x128xf32>
    %c0_10 = arith.constant 0 : index
    %c0_11 = arith.constant 0 : index
    %c0_12 = arith.constant 0 : index
    %21 = vector.load %arg6[%c0_10, %c0_11, %c0_12] : memref<2x16x128xf32, #tpu.memory_space<vmem>>, vector<1x16x128xf32>
    %22 = vector.shape_cast %21 : vector<1x16x128xf32> to vector<16x128xf32>
    %23 = vector.shape_cast %20 : vector<16x128xf32> to vector<1x16x128xf32>
    tpu.vector_store %arg6[%c0_10, %c0_11, %c0_12], %23 {strides = array<i32>} : memref<2x16x128xf32, #tpu.memory_space<vmem>>, vector<1x16x128xf32>,
    %cst_13 = arith.constant dense<0.000000e+00> : vector<128xf32>
    %24 = vector.multi_reduction <add>, %20, %cst_13 [0] : vector<16x128xf32> to vector<128xf32>
    %25 = vector.shape_cast %24 : vector<128xf32> to vector<1x128xf32>
    %26 = arith.addf %1, %25 : vector<1x128xf32>
    %27 = arith.mulf %20, %20 : vector<16x128xf32>
    %cst_14 = arith.constant dense<0.000000e+00> : vector<128xf32>
    %28 = vector.multi_reduction <add>, %27, %cst_14 [0] : vector<16x128xf32> to vector<128xf32>
    %29 = vector.shape_cast %28 : vector<128xf32> to vector<1x128xf32>
    %30 = arith.addf %2, %29 : vector<1x128xf32>
    %c1 = arith.constant 1 : index
    %c0_15 = arith.constant 0 : index
    %c0_16 = arith.constant 0 : index
    %31 = vector.load %arg1[%c1, %c0_15, %c0_16] : memref<2x18x64xf32, #tpu.memory_space<vmem>>, vector<1x18x64xf32>
    %32 = vector.shape_cast %31 : vector<1x18x64xf32> to vector<18x64xf32>
    %cst_17 = arith.constant 0.000000e+00 : f32
    %33 = vector.broadcast %cst_17 : f32 to vector<16x128xf32>
    %34 = vector.extract_strided_slice %32 {offsets = [0, 0], sizes = [16, 64], strides = [1, 1]} : vector<18x64xf32> to vector<16x64xf32>
    %35 = vector.extract_strided_slice %0 {offsets = [0, 0, 0], sizes = [1, 64, 128], strides = [1, 1, 1]} : vector<3x64x128xf32> to vector<1x64x128xf32>
    %36 = vector.shape_cast %35 : vector<1x64x128xf32> to vector<64x128xf32>
    %cst_18 = arith.constant dense<0.000000e+00> : vector<16x128xf32>
    %37 = tpu.matmul %34, %36, %cst_18 {dimension_numbers = #tpu.dot_dimension_numbers<[1], [0], [0], [1], [0, 0, 1, 1], [], []>} : vector<16x64xf32>, vector<64x128xf32>, vector<16x128xf32> -> vector<16x128xf32>
    %38 = arith.addf %33, %37 : vector<16x128xf32>
    %39 = vector.extract_strided_slice %32 {offsets = [1, 0], sizes = [16, 64], strides = [1, 1]} : vector<18x64xf32> to vector<16x64xf32>
    %40 = vector.extract_strided_slice %0 {offsets = [1, 0, 0], sizes = [1, 64, 128], strides = [1, 1, 1]} : vector<3x64x128xf32> to vector<1x64x128xf32>
    %41 = vector.shape_cast %40 : vector<1x64x128xf32> to vector<64x128xf32>
    %cst_19 = arith.constant dense<0.000000e+00> : vector<16x128xf32>
    %42 = tpu.matmul %39, %41, %cst_19 {dimension_numbers = #tpu.dot_dimension_numbers<[1], [0], [0], [1], [0, 0, 1, 1], [], []>} : vector<16x64xf32>, vector<64x128xf32>, vector<16x128xf32> -> vector<16x128xf32>
    %43 = arith.addf %38, %42 : vector<16x128xf32>
    %44 = vector.extract_strided_slice %32 {offsets = [2, 0], sizes = [16, 64], strides = [1, 1]} : vector<18x64xf32> to vector<16x64xf32>
    %45 = vector.extract_strided_slice %0 {offsets = [2, 0, 0], sizes = [1, 64, 128], strides = [1, 1, 1]} : vector<3x64x128xf32> to vector<1x64x128xf32>
    %46 = vector.shape_cast %45 : vector<1x64x128xf32> to vector<64x128xf32>
    %cst_20 = arith.constant dense<0.000000e+00> : vector<16x128xf32>
    %47 = tpu.matmul %44, %46, %cst_20 {dimension_numbers = #tpu.dot_dimension_numbers<[1], [0], [0], [1], [0, 0, 1, 1], [], []>} : vector<16x64xf32>, vector<64x128xf32>, vector<16x128xf32> -> vector<16x128xf32>
    %48 = arith.addf %43, %47 : vector<16x128xf32>
    %c1_21 = arith.constant 1 : index
    %c0_22 = arith.constant 0 : index
    %c0_23 = arith.constant 0 : index
    %49 = vector.load %arg6[%c1_21, %c0_22, %c0_23] : memref<2x16x128xf32, #tpu.memory_space<vmem>>, vector<1x16x128xf32>
    %50 = vector.shape_cast %49 : vector<1x16x128xf32> to vector<16x128xf32>
    %51 = vector.shape_cast %48 : vector<16x128xf32> to vector<1x16x128xf32>
    tpu.vector_store %arg6[%c1_21, %c0_22, %c0_23], %51 {strides = array<i32>} : memref<2x16x128xf32, #tpu.memory_space<vmem>>, vector<1x16x128xf32>,
    %cst_24 = arith.constant dense<0.000000e+00> : vector<128xf32>
    %52 = vector.multi_reduction <add>, %48, %cst_24 [0] : vector<16x128xf32> to vector<128xf32>
    %53 = vector.shape_cast %52 : vector<128xf32> to vector<1x128xf32>
    %54 = arith.addf %26, %53 : vector<1x128xf32>
    %55 = arith.mulf %48, %48 : vector<16x128xf32>
    %cst_25 = arith.constant dense<0.000000e+00> : vector<128xf32>
    %56 = vector.multi_reduction <add>, %55, %cst_25 [0] : vector<16x128xf32> to vector<128xf32>
    %57 = vector.shape_cast %56 : vector<128xf32> to vector<1x128xf32>
    %58 = arith.addf %30, %57 : vector<1x128xf32>
    %59 = tpu.concatenate %54, %58 in 0 : vector<1x128xf32>, vector<1x128xf32> -> vector<2x128xf32>
    %c0_26 = arith.constant 0 : index
    %c0_27 = arith.constant 0 : index
    %60 = vector.load %arg5[%c0_26, %c0_27] : memref<128x128xf32, #tpu.memory_space<vmem>>, vector<128x128xf32>
    %cst_28 = arith.constant dense<0.000000e+00> : vector<2x128xf32>
    %61 = tpu.matmul %59, %60, %cst_28 {dimension_numbers = #tpu.dot_dimension_numbers<[1], [0], [0], [1], [0, 0, 1, 1], [], []>} : vector<2x128xf32>, vector<128x128xf32>, vector<2x128xf32> -> vector<2x128xf32>
    %62 = vector.extract_strided_slice %61 {offsets = [0, 0], sizes = [1, 128], strides = [1, 1]} : vector<2x128xf32> to vector<1x128xf32>
    %cst_29 = arith.constant 0.001953125 : f32
    %63 = vector.broadcast %cst_29 : f32 to vector<1x128xf32>
    %64 = arith.mulf %62, %63 : vector<1x128xf32>
    %65 = vector.extract_strided_slice %61 {offsets = [1, 0], sizes = [1, 128], strides = [1, 1]} : vector<2x128xf32> to vector<1x128xf32>
    %cst_30 = arith.constant 0.001953125 : f32
    %66 = vector.broadcast %cst_30 : f32 to vector<1x128xf32>
    %67 = arith.mulf %65, %66 : vector<1x128xf32>
    %68 = arith.mulf %64, %64 : vector<1x128xf32>
    %69 = arith.subf %67, %68 : vector<1x128xf32>
    %c0_31 = arith.constant 0 : index
    %c0_32 = arith.constant 0 : index
    %70 = vector.load %arg3[%c0_31, %c0_32] : memref<1x128xf32, #tpu.memory_space<vmem>>, vector<1x128xf32>
    %cst_33 = arith.constant 9.99999974E-6 : f32
    %71 = vector.broadcast %cst_33 : f32 to vector<1x128xf32>
    %72 = arith.addf %69, %71 : vector<1x128xf32>
    %73 = math.rsqrt %72 : vector<1x128xf32>
    %74 = arith.mulf %70, %73 : vector<1x128xf32>
    %c0_34 = arith.constant 0 : index
    %c0_35 = arith.constant 0 : index
    %75 = vector.load %arg4[%c0_34, %c0_35] : memref<1x128xf32, #tpu.memory_space<vmem>>, vector<1x128xf32>
    %76 = arith.mulf %64, %74 : vector<1x128xf32>
    %77 = arith.subf %75, %76 : vector<1x128xf32>
    %c0_36 = arith.constant 0 : index
    %c0_37 = arith.constant 0 : index
    %c0_38 = arith.constant 0 : index
    %78 = vector.load %arg6[%c0_36, %c0_37, %c0_38] : memref<2x16x128xf32, #tpu.memory_space<vmem>>, vector<1x16x128xf32>
    %79 = vector.shape_cast %78 : vector<1x16x128xf32> to vector<16x128xf32>
    %80 = vector.broadcast %74 : vector<1x128xf32> to vector<16x128xf32>
    %81 = arith.mulf %79, %80 : vector<16x128xf32>
    %82 = vector.broadcast %77 : vector<1x128xf32> to vector<16x128xf32>
    %83 = arith.addf %81, %82 : vector<16x128xf32>
    %cst_39 = arith.constant 0.000000e+00 : f32
    %84 = vector.broadcast %cst_39 : f32 to vector<16x128xf32>
    %85 = arith.maximumf %83, %84 : vector<16x128xf32>
    %c0_40 = arith.constant 0 : index
    %c0_41 = arith.constant 0 : index
    %c0_42 = arith.constant 0 : index
    %86 = vector.load %arg6[%c0_40, %c0_41, %c0_42] : memref<2x16x128xf32, #tpu.memory_space<vmem>>, vector<1x16x128xf32>
    %87 = vector.shape_cast %86 : vector<1x16x128xf32> to vector<16x128xf32>
    %88 = vector.shape_cast %85 : vector<16x128xf32> to vector<1x16x128xf32>
    tpu.vector_store %arg6[%c0_40, %c0_41, %c0_42], %88 {strides = array<i32>} : memref<2x16x128xf32, #tpu.memory_space<vmem>>, vector<1x16x128xf32>,
    %c1_43 = arith.constant 1 : index
    %c0_44 = arith.constant 0 : index
    %c0_45 = arith.constant 0 : index
    %89 = vector.load %arg6[%c1_43, %c0_44, %c0_45] : memref<2x16x128xf32, #tpu.memory_space<vmem>>, vector<1x16x128xf32>
    %90 = vector.shape_cast %89 : vector<1x16x128xf32> to vector<16x128xf32>
    %91 = vector.broadcast %74 : vector<1x128xf32> to vector<16x128xf32>
    %92 = arith.mulf %90, %91 : vector<16x128xf32>
    %93 = vector.broadcast %77 : vector<1x128xf32> to vector<16x128xf32>
    %94 = arith.addf %92, %93 : vector<16x128xf32>
    %cst_46 = arith.constant 0.000000e+00 : f32
    %95 = vector.broadcast %cst_46 : f32 to vector<16x128xf32>
    %96 = arith.maximumf %94, %95 : vector<16x128xf32>
    %c1_47 = arith.constant 1 : index
    %c0_48 = arith.constant 0 : index
    %c0_49 = arith.constant 0 : index
    %97 = vector.load %arg6[%c1_47, %c0_48, %c0_49] : memref<2x16x128xf32, #tpu.memory_space<vmem>>, vector<1x16x128xf32>
    %98 = vector.shape_cast %97 : vector<1x16x128xf32> to vector<16x128xf32>
    %99 = vector.shape_cast %96 : vector<16x128xf32> to vector<1x16x128xf32>
    tpu.vector_store %arg6[%c1_47, %c0_48, %c0_49], %99 {strides = array<i32>} : memref<2x16x128xf32, #tpu.memory_space<vmem>>, vector<1x16x128xf32>,
    return
  }
  func.func @transform_0(%arg0: i32) -> (i32, i32, i32) {
    %c0_i32 = arith.constant 0 : i32
    %c0_i32_0 = arith.constant 0 : i32
    %c0_i32_1 = arith.constant 0 : i32
    %c0_i32_2 = arith.constant 0 : i32
    return %c0_i32, %c0_i32_0, %c0_i32_1 : i32, i32, i32
  }
  func.func @transform_1(%arg0: i32) -> (i32, i32, i32) {
    %c0_i32 = arith.constant 0 : i32
    %c0_i32_0 = arith.constant 0 : i32
    %c0_i32_1 = arith.constant 0 : i32
    %c0_i32_2 = arith.constant 0 : i32
    return %c0_i32, %c0_i32_0, %c0_i32_1 : i32, i32, i32
  }
  func.func @transform_2(%arg0: i32) -> (i32, i32) {
    %c0_i32 = arith.constant 0 : i32
    %c0_i32_0 = arith.constant 0 : i32
    %c0_i32_1 = arith.constant 0 : i32
    return %c0_i32, %c0_i32_0 : i32, i32
  }
  func.func @transform_3(%arg0: i32) -> (i32, i32) {
    %c0_i32 = arith.constant 0 : i32
    %c0_i32_0 = arith.constant 0 : i32
    %c0_i32_1 = arith.constant 0 : i32
    return %c0_i32, %c0_i32_0 : i32, i32
  }
  func.func @transform_4(%arg0: i32) -> (i32, i32) {
    %c0_i32 = arith.constant 0 : i32
    %c0_i32_0 = arith.constant 0 : i32
    %c0_i32_1 = arith.constant 0 : i32
    return %c0_i32, %c0_i32_0 : i32, i32
  }
  func.func @transform_5(%arg0: i32) -> (i32, i32, i32) {
    %c0_i32 = arith.constant 0 : i32
    %c0_i32_0 = arith.constant 0 : i32
    %c0_i32_1 = arith.constant 0 : i32
    %c0_i32_2 = arith.constant 0 : i32
    return %c0_i32, %c0_i32_0, %c0_i32_1 : i32, i32, i32
  }
}

</mosaic_0001>

<llo_original>
// kernel: tpu_custom_call.1
$region0: #{tpu_custom_call.1}
  #allocation0 [shape = 'u32[]', space=smem, size = 0x4, offset = 0x4, fixed_abs, tag = 'smem constant byte address 0x4 - core index']
  #allocation1 [shape = 'u32[144,128]{1,0:T(1,128)}', space=vmem, size = 0x12000, scoped, tag = 'internal scratch']
  %s0 = inlined_call_operand.vmem [shape: f32[2,18,64], index: 0, kind: input, shape index: {}]
  %s1 = inlined_call_operand.hbm [shape: f32[3,64,128], index: 1, kind: input, shape index: {}]
  %s2 = inlined_call_operand.vmem [shape: f32[1,128], index: 2, kind: input, shape index: {}]
  %s3 = inlined_call_operand.vmem [shape: f32[1,128], index: 3, kind: input, shape index: {}]
  %s4 = inlined_call_operand.hbm [shape: f32[128,128], index: 4, kind: input, shape index: {}]
  %s5 = inlined_call_operand.hbm [shape: f32[2,16,128], index: 5, kind: output, shape index: {}]
  %s6 = sld [smem:[#allocation0]]
  $region38: #{tpu_custom_call.1} parent=0
    _
  %s8 = ssub.s32 1, %s6
  %s9 = scalar_select 0, %s8, %s6
  $region1: #{tpu_custom_call.1} parent=0
    #allocation2 [shape = 'u8[98304]{0}', space=vmem, size = 0x18000, scoped, tag = 'input window, operand 1, single buffered']
    #allocation3 [shape = 's32[1]{0}', space=sflag, size = 0x4, scoped, tag = 'scoped memory for tpu_custom_call.1']
    #allocation4 [shape = 's32[1]{0}', space=sflag, size = 0x4, scoped, tag = 'scoped memory for tpu_custom_call.1']
    #allocation5 [shape = 'u8[65536]{0}', space=vmem, size = 0x10000, scoped, tag = 'input window, operand 4, single buffered']
    #allocation6 [shape = 's32[1]{0}', space=sflag, size = 0x4, scoped, tag = 'scoped memory for tpu_custom_call.1']
    #allocation7 [shape = 'u8[16384]{0}', space=vmem, size = 0x4000, scoped, tag = 'output window, operand 0, single buffered']
    %10 = vsyncpa [#allocation3], 0
    %11 = vsyncpa [#allocation6], 0
    %12 = vsyncpa [#allocation4], 0
    // Predicated region
    $region2: #{tpu_custom_call.1} parent=1 // pred_check
      _
    $region3: #{tpu_custom_call.1} parent=1 // pred_check_branch
      %14 = sbr.rel (0) target = $region5
    $region4: #{tpu_custom_call.1} parent=1 // pred_region
      _
    $region5: #{tpu_custom_call.1} parent=1 // pred_fallthru
      _
    // Predicated region
    $region6: #{tpu_custom_call.1} parent=1 // pred_check
      _
    $region7: #{tpu_custom_call.1} parent=1 // pred_check_branch
      %16 = sbr.rel (0) target = $region9
    $region8: #{tpu_custom_call.1} parent=1 // pred_region
      %s18 = ssub.s32 3072, 3072
      %19 = vsyncadd [#allocation3], %s18
      %s20 = sshll.u32 [#allocation2], 4
      %s21 = int_to_ptr.vmem [resolvable:$true] %s20
      %26 = dma.hbm_to_vmem [thread:$0]  %s1, 3072, %s21, [#allocation3], 128, 128, 8
    $region9: #{tpu_custom_call.1} parent=1 // pred_fallthru
      _
    // Predicated region
    $region10: #{tpu_custom_call.1} parent=1 // pred_check
      _
    $region11: #{tpu_custom_call.1} parent=1 // pred_check_branch
      %28 = sbr.rel (0) target = $region13
    $region12: #{tpu_custom_call.1} parent=1 // pred_region
      _
    $region13: #{tpu_custom_call.1} parent=1 // pred_fallthru
      _
    // Predicated region
    $region14: #{tpu_custom_call.1} parent=1 // pred_check
      _
    $region15: #{tpu_custom_call.1} parent=1 // pred_check_branch
      %30 = sbr.rel (0) target = $region17
    $region16: #{tpu_custom_call.1} parent=1 // pred_region
      _
    $region17: #{tpu_custom_call.1} parent=1 // pred_fallthru
      _
    // Predicated region
    $region18: #{tpu_custom_call.1} parent=1 // pred_check
      _
    $region19: #{tpu_custom_call.1} parent=1 // pred_check_branch
      %32 = sbr.rel (0) target = $region21
    $region20: #{tpu_custom_call.1} parent=1 // pred_region
      %s34 = ssub.s32 2048, 2048
      %35 = vsyncadd [#allocation6], %s34
      %s36 = sshll.u32 [#allocation5], 4
      %s37 = int_to_ptr.vmem [resolvable:$true] %s36
      %42 = dma.hbm_to_vmem [thread:$0]  %s4, 2048, %s37, [#allocation6], 128, 128, 8
    $region21: #{tpu_custom_call.1} parent=1 // pred_fallthru
      _
    // Predicated region
    $region22: #{tpu_custom_call.1} parent=1 // pred_check
      _
    $region23: #{tpu_custom_call.1} parent=1 // pred_check_branch
      %44 = sbr.rel (0) target = $region25
    $region24: #{tpu_custom_call.1} parent=1 // pred_region
      %45 = dma.done [#allocation3], 3072
    $region25: #{tpu_custom_call.1} parent=1 // pred_fallthru
      _
    // Predicated region
    $region26: #{tpu_custom_call.1} parent=1 // pred_check
      _
    $region27: #{tpu_custom_call.1} parent=1 // pred_check_branch
      %47 = sbr.rel (0) target = $region29
    $region28: #{tpu_custom_call.1} parent=1 // pred_region
      %48 = dma.done [#allocation6], 2048
    $region29: #{tpu_custom_call.1} parent=1 // pred_fallthru
      _
    %v49 = vld [vmem:[#allocation2] sm:$0xff]
    %v50 = vld [vmem:[#allocation2 + $0x8] sm:$0xff]
    %v51 = vld [vmem:[#allocation2 + $0x10] sm:$0xff]
    %v52 = vld [vmem:[#allocation2 + $0x18] sm:$0xff]
    %v53 = vld [vmem:[#allocation2 + $0x20] sm:$0xff]
    %v54 = vld [vmem:[#allocation2 + $0x28] sm:$0xff]
    %v55 = vld [vmem:[#allocation2 + $0x30] sm:$0xff]
    %v56 = vld [vmem:[#allocation2 + $0x38] sm:$0xff]
    %v57 = vld [vmem:[#allocation2 + $0x40] sm:$0xff]
    %v58 = vld [vmem:[#allocation2 + $0x48] sm:$0xff]
    %v59 = vld [vmem:[#allocation2 + $0x50] sm:$0xff]
    %v60 = vld [vmem:[#allocation2 + $0x58] sm:$0xff]
    %v61 = vld [vmem:[#allocation2 + $0x60] sm:$0xff]
    %v62 = vld [vmem:[#allocation2 + $0x68] sm:$0xff]
    %v63 = vld [vmem:[#allocation2 + $0x70] sm:$0xff]
    %v64 = vld [vmem:[#allocation2 + $0x78] sm:$0xff]
    %v65 = vld [vmem:[#allocation2 + $0x80] sm:$0xff]
    %v66 = vld [vmem:[#allocation2 + $0x88] sm:$0xff]
    %v67 = vld [vmem:[#allocation2 + $0x90] sm:$0xff]
    %v68 = vld [vmem:[#allocation2 + $0x98] sm:$0xff]
    %v69 = vld [vmem:[#allocation2 + $0xa0] sm:$0xff]
    %v70 = vld [vmem:[#allocation2 + $0xa8] sm:$0xff]
    %v71 = vld [vmem:[#allocation2 + $0xb0] sm:$0xff]
    %v72 = vld [vmem:[#allocation2 + $0xb8] sm:$0xff]
    %v73 = vld [vmem:[%s0] sm:$0xff]
    %v74 = vld [vmem:[%s0 + $0x8] sm:$0xff]
    %v75 = vld [vmem:[%s0 + $0x10] sm:$0x3]
    %vm79 = vcmask 1046528
    %v80 = vrot.slane %v73, 1
    %v81 = vrot.slane %v74, 1
    %v82 = vsel %vm79, %v80, %v81
    %v83 = vrot.slane %v75, 1
    %v84 = vsel %vm79, %v81, %v83
    %vm85 = vcmask 523264
    %v86 = vsel %vm85, %v82, 0
    %v88 = vsel %vm85, %v84, 0
    %90 = vmatprep.subr.mxu0 0.0
    %91 = vmatpush1.msra.mxu0 %v57
    %92 = vmatprep.subr.mxu0 0.0
    %93 = vmatpush1.msra.mxu0 %v58
    %94 = vmatprep.subr.mxu0 0.0
    %95 = vmatpush1.msra.mxu0 %v59
    %96 = vmatprep.subr.mxu0 0.0
    %97 = vmatpush1.msra.mxu0 %v60
    %98 = vmatprep.subr.mxu0 0.0
    %99 = vmatpush1.msra.mxu0 %v61
    %100 = vmatprep.subr.mxu0 0.0
    %101 = vmatpush1.msra.mxu0 %v62
    %102 = vmatprep.subr.mxu0 0.0
    %103 = vmatpush1.msra.mxu0 %v63
    %104 = vmatprep.subr.mxu0 0.0
    %105 = vmatpush1.msra.mxu0 %v64
    %106 = vmatprep.subr.mxu0 0.0
    %107 = vmatpush1.msra.mxu0 0.0
    %108 = vmatprep.subr.mxu0 0.0
    %109 = vmatpush1.msra.mxu0 0.0
    %110 = vmatprep.subr.mxu0 0.0
    %111 = vmatpush1.msra.mxu0 0.0
    %112 = vmatprep.subr.mxu0 0.0
    %113 = vmatpush1.msra.mxu0 0.0
    %114 = vmatprep.subr.mxu0 0.0
    %115 = vmatpush1.msra.mxu0 0.0
    %116 = vmatprep.subr.mxu0 0.0
    %117 = vmatpush1.msra.mxu0 0.0
    %118 = vmatprep.subr.mxu0 0.0
    %119 = vmatpush1.msra.mxu0 0.0
    %120 = vmatprep.subr.mxu0 0.0
    %121 = vmatpush1.msra.mxu0 0.0
    %122 = vmatprep.subr.mxu0 0.0
    %123 = vmatpush1.msra.mxu0 0.0
    %124 = vmatprep.subr.mxu0 0.0
    %125 = vmatpush1.msra.mxu0 0.0
    %126 = vmatprep.subr.mxu0 0.0
    %127 = vmatpush1.msra.mxu0 0.0
    %128 = vmatprep.subr.mxu0 0.0
    %129 = vmatpush1.msra.mxu0 0.0
    %130 = vmatprep.subr.mxu0 0.0
    %131 = vmatpush1.msra.mxu0 0.0
    %132 = vmatprep.subr.mxu0 0.0
    %133 = vmatpush1.msra.mxu0 0.0
    %134 = vmatprep.subr.mxu0 0.0
    %135 = vmatpush1.msra.mxu0 0.0
    %136 = vmatprep.subr.mxu0 0.0
    %137 = vmatpush1.msra.mxu0 0.0
    %138 = vmatprep.subr.mxu0 0.0
    %139 = vmatpush1.msra.mxu0 0.0
    %140 = vmatprep.subr.mxu0 0.0
    %141 = vmatpush1.msra.mxu0 0.0
    %142 = vmatprep.subr.mxu0 0.0
    %143 = vmatpush1.msra.mxu0 0.0
    %144 = vmatprep.subr.mxu0 0.0
    %145 = vmatpush1.msra.mxu0 0.0
    %146 = vmatprep.subr.mxu0 0.0
    %147 = vmatpush1.msra.mxu0 0.0
    %148 = vmatprep.subr.mxu0 0.0
    %149 = vmatpush1.msra.mxu0 0.0
    %150 = vmatprep.subr.mxu0 0.0
    %151 = vmatpush1.msra.mxu0 0.0
    %152 = vmatprep.subr.mxu0 0.0
    %153 = vmatpush1.msra.mxu0 0.0
    %154 = vmatprep.mubr.f32.mxu0 0.0
    %155 = vmatmul.mubr.f32.gmra.mrb[0].mxu0 %v86
    %v156 = vpop.f32.mrb[0].mxu0
    %v157 = vadd.f32 0.0, %v156
    %v158 = vpop.f32.mrb[0].mxu0
    %159 = vmatprep.mubr.f32.mxu0 0.0
    %160 = vmatmul.mubr.f32.gmra.mrb[0].mxu0 %v88
    %v161 = vpop.f32.mrb[0].mxu0
    %v162 = vadd.f32 0.0, %v161
    %v163 = vpop.f32.mrb[0].mxu0
    %164 = vdwg.mxu0
    %v165 = vsel %vm85, %v73, 0
    %v167 = vsel %vm85, %v74, 0
    %169 = vmatprep.subr.mxu0 0.0
    %170 = vmatpush1.msra.mxu0 %v49
    %171 = vmatprep.subr.mxu0 0.0
    %172 = vmatpush1.msra.mxu0 %v50
    %173 = vmatprep.subr.mxu0 0.0
    %174 = vmatpush1.msra.mxu0 %v51
    %175 = vmatprep.subr.mxu0 0.0
    %176 = vmatpush1.msra.mxu0 %v52
    %177 = vmatprep.subr.mxu0 0.0
    %178 = vmatpush1.msra.mxu0 %v53
    %179 = vmatprep.subr.mxu0 0.0
    %180 = vmatpush1.msra.mxu0 %v54
    %181 = vmatprep.subr.mxu0 0.0
    %182 = vmatpush1.msra.mxu0 %v55
    %183 = vmatprep.subr.mxu0 0.0
    %184 = vmatpush1.msra.mxu0 %v56
    %185 = vmatprep.subr.mxu0 0.0
    %186 = vmatpush1.msra.mxu0 0.0
    %187 = vmatprep.subr.mxu0 0.0
    %188 = vmatpush1.msra.mxu0 0.0
    %189 = vmatprep.subr.mxu0 0.0
    %190 = vmatpush1.msra.mxu0 0.0
    %191 = vmatprep.subr.mxu0 0.0
    %192 = vmatpush1.msra.mxu0 0.0
    %193 = vmatprep.subr.mxu0 0.0
    %194 = vmatpush1.msra.mxu0 0.0
    %195 = vmatprep.subr.mxu0 0.0
    %196 = vmatpush1.msra.mxu0 0.0
    %197 = vmatprep.subr.mxu0 0.0
    %198 = vmatpush1.msra.mxu0 0.0
    %199 = vmatprep.subr.mxu0 0.0
    %200 = vmatpush1.msra.mxu0 0.0
    %201 = vmatprep.subr.mxu0 0.0
    %202 = vmatpush1.msra.mxu0 0.0
    %203 = vmatprep.subr.mxu0 0.0
    %204 = vmatpush1.msra.mxu0 0.0
    %205 = vmatprep.subr.mxu0 0.0
    %206 = vmatpush1.msra.mxu0 0.0
    %207 = vmatprep.subr.mxu0 0.0
    %208 = vmatpush1.msra.mxu0 0.0
    %209 = vmatprep.subr.mxu0 0.0
    %210 = vmatpush1.msra.mxu0 0.0
    %211 = vmatprep.subr.mxu0 0.0
    %212 = vmatpush1.msra.mxu0 0.0
    %213 = vmatprep.subr.mxu0 0.0
    %214 = vmatpush1.msra.mxu0 0.0
    %215 = vmatprep.subr.mxu0 0.0
    %216 = vmatpush1.msra.mxu0 0.0
    %217 = vmatprep.subr.mxu0 0.0
    %218 = vmatpush1.msra.mxu0 0.0
    %219 = vmatprep.subr.mxu0 0.0
    %220 = vmatpush1.msra.mxu0 0.0
    %221 = vmatprep.subr.mxu0 0.0
    %222 = vmatpush1.msra.mxu0 0.0
    %223 = vmatprep.subr.mxu0 0.0
    %224 = vmatpush1.msra.mxu0 0.0
    %225 = vmatprep.subr.mxu0 0.0
    %226 = vmatpush1.msra.mxu0 0.0
    %227 = vmatprep.subr.mxu0 0.0
    %228 = vmatpush1.msra.mxu0 0.0
    %229 = vmatprep.subr.mxu0 0.0
    %230 = vmatpush1.msra.mxu0 0.0
    %231 = vmatprep.subr.mxu0 0.0
    %232 = vmatpush1.msra.mxu0 0.0
    %233 = vmatprep.mubr.f32.mxu0 0.0
    %234 = vmatmul.mubr.f32.gmra.mrb[0].mxu0 %v165
    %v235 = vpop.f32.mrb[0].mxu0
    %v236 = vadd.f32 %v157, %v235
    %v237 = vpop.f32.mrb[0].mxu0
    %238 = vmatprep.mubr.f32.mxu0 0.0
    %239 = vmatmul.mubr.f32.gmra.mrb[0].mxu0 %v167
    %v240 = vpop.f32.mrb[0].mxu0
    %v241 = vadd.f32 %v162, %v240
    %v242 = vpop.f32.mrb[0].mxu0
    %243 = vdwg.mxu0
    %vm244 = vcmask 1045504
    %v245 = vrot.slane %v73, 2
    %v246 = vrot.slane %v74, 2
    %v247 = vsel %vm244, %v245, %v246
    %v248 = vrot.slane %v75, 2
    %v249 = vsel %vm244, %v246, %v248
    %v250 = vsel %vm85, %v247, 0
    %v252 = vsel %vm85, %v249, 0
    %254 = vmatprep.subr.mxu0 0.0
    %255 = vmatpush1.msra.mxu0 %v65
    %256 = vmatprep.subr.mxu0 0.0
    %257 = vmatpush1.msra.mxu0 %v66
    %258 = vmatprep.subr.mxu0 0.0
    %259 = vmatpush1.msra.mxu0 %v67
    %260 = vmatprep.subr.mxu0 0.0
    %261 = vmatpush1.msra.mxu0 %v68
    %262 = vmatprep.subr.mxu0 0.0
    %263 = vmatpush1.msra.mxu0 %v69
    %264 = vmatprep.subr.mxu0 0.0
    %265 = vmatpush1.msra.mxu0 %v70
    %266 = vmatprep.subr.mxu0 0.0
    %267 = vmatpush1.msra.mxu0 %v71
    %268 = vmatprep.subr.mxu0 0.0
    %269 = vmatpush1.msra.mxu0 %v72
    %270 = vmatprep.subr.mxu0 0.0
    %271 = vmatpush1.msra.mxu0 0.0
    %272 = vmatprep.subr.mxu0 0.0
    %273 = vmatpush1.msra.mxu0 0.0
    %274 = vmatprep.subr.mxu0 0.0
    %275 = vmatpush1.msra.mxu0 0.0
    %276 = vmatprep.subr.mxu0 0.0
    %277 = vmatpush1.msra.mxu0 0.0
    %278 = vmatprep.subr.mxu0 0.0
    %279 = vmatpush1.msra.mxu0 0.0
    %280 = vmatprep.subr.mxu0 0.0
    %281 = vmatpush1.msra.mxu0 0.0
    %282 = vmatprep.subr.mxu0 0.0
    %283 = vmatpush1.msra.mxu0 0.0
    %284 = vmatprep.subr.mxu0 0.0
    %285 = vmatpush1.msra.mxu0 0.0
    %286 = vmatprep.subr.mxu0 0.0
    %287 = vmatpush1.msra.mxu0 0.0
    %288 = vmatprep.subr.mxu0 0.0
    %289 = vmatpush1.msra.mxu0 0.0
    %290 = vmatprep.subr.mxu0 0.0
    %291 = vmatpush1.msra.mxu0 0.0
    %292 = vmatprep.subr.mxu0 0.0
    %293 = vmatpush1.msra.mxu0 0.0
    %294 = vmatprep.subr.mxu0 0.0
    %295 = vmatpush1.msra.mxu0 0.0
    %296 = vmatprep.subr.mxu0 0.0
    %297 = vmatpush1.msra.mxu0 0.0
    %298 = vmatprep.subr.mxu0 0.0
    %299 = vmatpush1.msra.mxu0 0.0
    %300 = vmatprep.subr.mxu0 0.0
    %301 = vmatpush1.msra.mxu0 0.0
    %302 = vmatprep.subr.mxu0 0.0
    %303 = vmatpush1.msra.mxu0 0.0
    %304 = vmatprep.subr.mxu0 0.0
    %305 = vmatpush1.msra.mxu0 0.0
    %306 = vmatprep.subr.mxu0 0.0
    %307 = vmatpush1.msra.mxu0 0.0
    %308 = vmatprep.subr.mxu0 0.0
    %309 = vmatpush1.msra.mxu0 0.0
    %310 = vmatprep.subr.mxu0 0.0
    %311 = vmatpush1.msra.mxu0 0.0
    %312 = vmatprep.subr.mxu0 0.0
    %313 = vmatpush1.msra.mxu0 0.0
    %314 = vmatprep.subr.mxu0 0.0
    %315 = vmatpush1.msra.mxu0 0.0
    %316 = vmatprep.subr.mxu0 0.0
    %317 = vmatpush1.msra.mxu0 0.0
    %318 = vmatprep.mubr.f32.mxu0 0.0
    %319 = vmatmul.mubr.f32.gmra.mrb[0].mxu0 %v250
    %v320 = vpop.f32.mrb[0].mxu0
    %v321 = vadd.f32 0.0, %v320
    %v322 = vpop.f32.mrb[0].mxu0
    %323 = vmatprep.mubr.f32.mxu0 0.0
    %324 = vmatmul.mubr.f32.gmra.mrb[0].mxu0 %v252
    %v325 = vpop.f32.mrb[0].mxu0
    %v326 = vadd.f32 0.0, %v325
    %v327 = vpop.f32.mrb[0].mxu0
    %328 = vdwg.mxu0
    %v329 = vadd.f32 %v236, %v321
    %v330 = vadd.f32 %v241, %v326
    %331 = vst [vmem:[#allocation7] sm:$0xff] %v329
    %332 = vst [vmem:[#allocation7 + $0x8] sm:$0xff] %v330
    %v333 = vadd.f32 %v329, %v330
    %v334 = vrot.slane %v333, 4
    %v335 = vadd.f32 %v333, %v334
    %v336 = vrot.slane %v335, 2
    %v337 = vadd.f32 %v335, %v336
    %v338 = vrot.slane %v337, 1
    %v339 = vadd.f32 %v337, %v338
    %v340 = vadd.f32 %v339, 0.0
    %v341 = vmul.f32 %v329, %v329
    %v342 = vmul.f32 %v330, %v330
    %v343 = vadd.f32 %v341, %v342
    %v344 = vrot.slane %v343, 4
    %v345 = vadd.f32 %v343, %v344
    %v346 = vrot.slane %v345, 2
    %v347 = vadd.f32 %v345, %v346
    %v348 = vrot.slane %v347, 1
    %v349 = vadd.f32 %v347, %v348
    %v350 = vadd.f32 %v349, 0.0
    %s351 = scalar_lea.vmem %s0, 24
    %v352 = vld [vmem:[%s351] sm:$0xff]
    %v353 = vld [vmem:[%s351 + $0x8] sm:$0xff]
    %v354 = vld [vmem:[%s351 + $0x10] sm:$0x3]
    %v358 = vrot.slane %v352, 1
    %v359 = vrot.slane %v353, 1
    %v360 = vsel %vm79, %v358, %v359
    %v361 = vrot.slane %v354, 1
    %v362 = vsel %vm79, %v359, %v361
    %v363 = vsel %vm85, %v360, 0
    %v365 = vsel %vm85, %v362, 0
    %367 = vmatprep.subr.mxu0 0.0
    %368 = vmatpush1.msra.mxu0 %v57
    %369 = vmatprep.subr.mxu0 0.0
    %370 = vmatpush1.msra.mxu0 %v58
    %371 = vmatprep.subr.mxu0 0.0
    %372 = vmatpush1.msra.mxu0 %v59
    %373 = vmatprep.subr.mxu0 0.0
    %374 = vmatpush1.msra.mxu0 %v60
    %375 = vmatprep.subr.mxu0 0.0
    %376 = vmatpush1.msra.mxu0 %v61
    %377 = vmatprep.subr.mxu0 0.0
    %378 = vmatpush1.msra.mxu0 %v62
    %379 = vmatprep.subr.mxu0 0.0
    %380 = vmatpush1.msra.mxu0 %v63
    %381 = vmatprep.subr.mxu0 0.0
    %382 = vmatpush1.msra.mxu0 %v64
    %383 = vmatprep.subr.mxu0 0.0
    %384 = vmatpush1.msra.mxu0 0.0
    %385 = vmatprep.subr.mxu0 0.0
    %386 = vmatpush1.msra.mxu0 0.0
    %387 = vmatprep.subr.mxu0 0.0
    %388 = vmatpush1.msra.mxu0 0.0
    %389 = vmatprep.subr.mxu0 0.0
    %390 = vmatpush1.msra.mxu0 0.0
    %391 = vmatprep.subr.mxu0 0.0
    %392 = vmatpush1.msra.mxu0 0.0
    %393 = vmatprep.subr.mxu0 0.0
    %394 = vmatpush1.msra.mxu0 0.0
    %395 = vmatprep.subr.mxu0 0.0
    %396 = vmatpush1.msra.mxu0 0.0
    %397 = vmatprep.subr.mxu0 0.0
    %398 = vmatpush1.msra.mxu0 0.0
    %399 = vmatprep.subr.mxu0 0.0
    %400 = vmatpush1.msra.mxu0 0.0
    %401 = vmatprep.subr.mxu0 0.0
    %402 = vmatpush1.msra.mxu0 0.0
    %403 = vmatprep.subr.mxu0 0.0
    %404 = vmatpush1.msra.mxu0 0.0
    %405 = vmatprep.subr.mxu0 0.0
    %406 = vmatpush1.msra.mxu0 0.0
    %407 = vmatprep.subr.mxu0 0.0
    %408 = vmatpush1.msra.mxu0 0.0
    %409 = vmatprep.subr.mxu0 0.0
    %410 = vmatpush1.msra.mxu0 0.0
    %411 = vmatprep.subr.mxu0 0.0
    %412 = vmatpush1.msra.mxu0 0.0
    %413 = vmatprep.subr.mxu0 0.0
    %414 = vmatpush1.msra.mxu0 0.0
    %415 = vmatprep.subr.mxu0 0.0
    %416 = vmatpush1.msra.mxu0 0.0
    %417 = vmatprep.subr.mxu0 0.0
    %418 = vmatpush1.msra.mxu0 0.0
    %419 = vmatprep.subr.mxu0 0.0
    %420 = vmatpush1.msra.mxu0 0.0
    %421 = vmatprep.subr.mxu0 0.0
    %422 = vmatpush1.msra.mxu0 0.0
    %423 = vmatprep.subr.mxu0 0.0
    %424 = vmatpush1.msra.mxu0 0.0
    %425 = vmatprep.subr.mxu0 0.0
    %426 = vmatpush1.msra.mxu0 0.0
    %427 = vmatprep.subr.mxu0 0.0
    %428 = vmatpush1.msra.mxu0 0.0
    %429 = vmatprep.subr.mxu0 0.0
    %430 = vmatpush1.msra.mxu0 0.0
    %431 = vmatprep.mubr.f32.mxu0 0.0
    %432 = vmatmul.mubr.f32.gmra.mrb[0].mxu0 %v363
    %v433 = vpop.f32.mrb[0].mxu0
    %v434 = vadd.f32 0.0, %v433
    %v435 = vpop.f32.mrb[0].mxu0
    %436 = vmatprep.mubr.f32.mxu0 0.0
    %437 = vmatmul.mubr.f32.gmra.mrb[0].mxu0 %v365
    %v438 = vpop.f32.mrb[0].mxu0
    %v439 = vadd.f32 0.0, %v438
    %v440 = vpop.f32.mrb[0].mxu0
    %441 = vdwg.mxu0
    %v442 = vsel %vm85, %v352, 0
    %v444 = vsel %vm85, %v353, 0
    %446 = vmatprep.subr.mxu0 0.0
    %447 = vmatpush1.msra.mxu0 %v49
    %448 = vmatprep.subr.mxu0 0.0
    %449 = vmatpush1.msra.mxu0 %v50
    %450 = vmatprep.subr.mxu0 0.0
    %451 = vmatpush1.msra.mxu0 %v51
    %452 = vmatprep.subr.mxu0 0.0
    %453 = vmatpush1.msra.mxu0 %v52
    %454 = vmatprep.subr.mxu0 0.0
    %455 = vmatpush1.msra.mxu0 %v53
    %456 = vmatprep.subr.mxu0 0.0
    %457 = vmatpush1.msra.mxu0 %v54
    %458 = vmatprep.subr.mxu0 0.0
    %459 = vmatpush1.msra.mxu0 %v55
    %460 = vmatprep.subr.mxu0 0.0
    %461 = vmatpush1.msra.mxu0 %v56
    %462 = vmatprep.subr.mxu0 0.0
    %463 = vmatpush1.msra.mxu0 0.0
    %464 = vmatprep.subr.mxu0 0.0
    %465 = vmatpush1.msra.mxu0 0.0
    %466 = vmatprep.subr.mxu0 0.0
    %467 = vmatpush1.msra.mxu0 0.0
    %468 = vmatprep.subr.mxu0 0.0
    %469 = vmatpush1.msra.mxu0 0.0
    %470 = vmatprep.subr.mxu0 0.0
    %471 = vmatpush1.msra.mxu0 0.0
    %472 = vmatprep.subr.mxu0 0.0
    %473 = vmatpush1.msra.mxu0 0.0
    %474 = vmatprep.subr.mxu0 0.0
    %475 = vmatpush1.msra.mxu0 0.0
    %476 = vmatprep.subr.mxu0 0.0
    %477 = vmatpush1.msra.mxu0 0.0
    %478 = vmatprep.subr.mxu0 0.0
    %479 = vmatpush1.msra.mxu0 0.0
    %480 = vmatprep.subr.mxu0 0.0
    %481 = vmatpush1.msra.mxu0 0.0
    %482 = vmatprep.subr.mxu0 0.0
    %483 = vmatpush1.msra.mxu0 0.0
    %484 = vmatprep.subr.mxu0 0.0
    %485 = vmatpush1.msra.mxu0 0.0
    %486 = vmatprep.subr.mxu0 0.0
    %487 = vmatpush1.msra.mxu0 0.0
    %488 = vmatprep.subr.mxu0 0.0
    %489 = vmatpush1.msra.mxu0 0.0
    %490 = vmatprep.subr.mxu0 0.0
    %491 = vmatpush1.msra.mxu0 0.0
    %492 = vmatprep.subr.mxu0 0.0
    %493 = vmatpush1.msra.mxu0 0.0
    %494 = vmatprep.subr.mxu0 0.0
    %495 = vmatpush1.msra.mxu0 0.0
    %496 = vmatprep.subr.mxu0 0.0
    %497 = vmatpush1.msra.mxu0 0.0
    %498 = vmatprep.subr.mxu0 0.0
    %499 = vmatpush1.msra.mxu0 0.0
    %500 = vmatprep.subr.mxu0 0.0
    %501 = vmatpush1.msra.mxu0 0.0
    %502 = vmatprep.subr.mxu0 0.0
    %503 = vmatpush1.msra.mxu0 0.0
    %504 = vmatprep.subr.mxu0 0.0
    %505 = vmatpush1.msra.mxu0 0.0
    %506 = vmatprep.subr.mxu0 0.0
    %507 = vmatpush1.msra.mxu0 0.0
    %508 = vmatprep.subr.mxu0 0.0
    %509 = vmatpush1.msra.mxu0 0.0
    %510 = vmatprep.mubr.f32.mxu0 0.0
    %511 = vmatmul.mubr.f32.gmra.mrb[0].mxu0 %v442
    %v512 = vpop.f32.mrb[0].mxu0
    %v513 = vadd.f32 %v434, %v512
    %v514 = vpop.f32.mrb[0].mxu0
    %515 = vmatprep.mubr.f32.mxu0 0.0
    %516 = vmatmul.mubr.f32.gmra.mrb[0].mxu0 %v444
    %v517 = vpop.f32.mrb[0].mxu0
    %v518 = vadd.f32 %v439, %v517
    %v519 = vpop.f32.mrb[0].mxu0
    %520 = vdwg.mxu0
    %v521 = vrot.slane %v352, 2
    %v522 = vrot.slane %v353, 2
    %v523 = vsel %vm244, %v521, %v522
    %v524 = vrot.slane %v354, 2
    %v525 = vsel %vm244, %v522, %v524
    %v526 = vsel %vm85, %v523, 0
    %v528 = vsel %vm85, %v525, 0
    %530 = vmatprep.subr.mxu0 0.0
    %531 = vmatpush1.msra.mxu0 %v65
    %532 = vmatprep.subr.mxu0 0.0
    %533 = vmatpush1.msra.mxu0 %v66
    %534 = vmatprep.subr.mxu0 0.0
    %535 = vmatpush1.msra.mxu0 %v67
    %536 = vmatprep.subr.mxu0 0.0
    %537 = vmatpush1.msra.mxu0 %v68
    %538 = vmatprep.subr.mxu0 0.0
    %539 = vmatpush1.msra.mxu0 %v69
    %540 = vmatprep.subr.mxu0 0.0
    %541 = vmatpush1.msra.mxu0 %v70
    %542 = vmatprep.subr.mxu0 0.0
    %543 = vmatpush1.msra.mxu0 %v71
    %544 = vmatprep.subr.mxu0 0.0
    %545 = vmatpush1.msra.mxu0 %v72
    %546 = vmatprep.subr.mxu0 0.0
    %547 = vmatpush1.msra.mxu0 0.0
    %548 = vmatprep.subr.mxu0 0.0
    %549 = vmatpush1.msra.mxu0 0.0
    %550 = vmatprep.subr.mxu0 0.0
    %551 = vmatpush1.msra.mxu0 0.0
    %552 = vmatprep.subr.mxu0 0.0
    %553 = vmatpush1.msra.mxu0 0.0
    %554 = vmatprep.subr.mxu0 0.0
    %555 = vmatpush1.msra.mxu0 0.0
    %556 = vmatprep.subr.mxu0 0.0
    %557 = vmatpush1.msra.mxu0 0.0
    %558 = vmatprep.subr.mxu0 0.0
    %559 = vmatpush1.msra.mxu0 0.0
    %560 = vmatprep.subr.mxu0 0.0
    %561 = vmatpush1.msra.mxu0 0.0
    %562 = vmatprep.subr.mxu0 0.0
    %563 = vmatpush1.msra.mxu0 0.0
    %564 = vmatprep.subr.mxu0 0.0
    %565 = vmatpush1.msra.mxu0 0.0
    %566 = vmatprep.subr.mxu0 0.0
    %567 = vmatpush1.msra.mxu0 0.0
    %568 = vmatprep.subr.mxu0 0.0
    %569 = vmatpush1.msra.mxu0 0.0
    %570 = vmatprep.subr.mxu0 0.0
    %571 = vmatpush1.msra.mxu0 0.0
    %572 = vmatprep.subr.mxu0 0.0
    %573 = vmatpush1.msra.mxu0 0.0
    %574 = vmatprep.subr.mxu0 0.0
    %575 = vmatpush1.msra.mxu0 0.0
    %576 = vmatprep.subr.mxu0 0.0
    %577 = vmatpush1.msra.mxu0 0.0
    %578 = vmatprep.subr.mxu0 0.0
    %579 = vmatpush1.msra.mxu0 0.0
    %580 = vmatprep.subr.mxu0 0.0
    %581 = vmatpush1.msra.mxu0 0.0
    %582 = vmatprep.subr.mxu0 0.0
    %583 = vmatpush1.msra.mxu0 0.0
    %584 = vmatprep.subr.mxu0 0.0
    %585 = vmatpush1.msra.mxu0 0.0
    %586 = vmatprep.subr.mxu0 0.0
    %587 = vmatpush1.msra.mxu0 0.0
    %588 = vmatprep.subr.mxu0 0.0
    %589 = vmatpush1.msra.mxu0 0.0
    %590 = vmatprep.subr.mxu0 0.0
    %591 = vmatpush1.msra.mxu0 0.0
    %592 = vmatprep.subr.mxu0 0.0
    %593 = vmatpush1.msra.mxu0 0.0
    %594 = vmatprep.mubr.f32.mxu0 0.0
    %595 = vmatmul.mubr.f32.gmra.mrb[0].mxu0 %v526
    %v596 = vpop.f32.mrb[0].mxu0
    %v597 = vadd.f32 0.0, %v596
    %v598 = vpop.f32.mrb[0].mxu0
    %599 = vmatprep.mubr.f32.mxu0 0.0
    %600 = vmatmul.mubr.f32.gmra.mrb[0].mxu0 %v528
    %v601 = vpop.f32.mrb[0].mxu0
    %v602 = vadd.f32 0.0, %v601
    %v603 = vpop.f32.mrb[0].mxu0
    %604 = vdwg.mxu0
    %v605 = vadd.f32 %v513, %v597
    %v606 = vadd.f32 %v518, %v602
    %s607 = scalar_lea.vmem [#allocation7], 16
    %608 = vst [vmem:[%s607] sm:$0xff] %v605
    %609 = vst [vmem:[%s607 + $0x8] sm:$0xff] %v606
    %v610 = vadd.f32 %v605, %v606
    %v611 = vrot.slane %v610, 4
    %v612 = vadd.f32 %v610, %v611
    %v613 = vrot.slane %v612, 2
    %v614 = vadd.f32 %v612, %v613
    %v615 = vrot.slane %v614, 1
    %v616 = vadd.f32 %v614, %v615
    %v617 = vadd.f32 %v340, %v616
    %v618 = vmul.f32 %v605, %v605
    %v619 = vmul.f32 %v606, %v606
    %v620 = vadd.f32 %v618, %v619
    %v621 = vrot.slane %v620, 4
    %v622 = vadd.f32 %v620, %v621
    %v623 = vrot.slane %v622, 2
    %v624 = vadd.f32 %v622, %v623
    %v625 = vrot.slane %v624, 1
    %v626 = vadd.f32 %v624, %v625
    %v627 = vadd.f32 %v350, %v626
    %vm628 = vcmask 1040384
    %v629 = vsel %vm628, %v617, %v627
    %v630 = vld [vmem:[#allocation5] sm:$0xff]
    %v631 = vld [vmem:[#allocation5 + $0x8] sm:$0xff]
    %v632 = vld [vmem:[#allocation5 + $0x10] sm:$0xff]
    %v633 = vld [vmem:[#allocation5 + $0x18] sm:$0xff]
    %v634 = vld [vmem:[#allocation5 + $0x20] sm:$0xff]
    %v635 = vld [vmem:[#allocation5 + $0x28] sm:$0xff]
    %v636 = vld [vmem:[#allocation5 + $0x30] sm:$0xff]
    %v637 = vld [vmem:[#allocation5 + $0x38] sm:$0xff]
    %v638 = vld [vmem:[#allocation5 + $0x40] sm:$0xff]
    %v639 = vld [vmem:[#allocation5 + $0x48] sm:$0xff]
    %v640 = vld [vmem:[#allocation5 + $0x50] sm:$0xff]
    %v641 = vld [vmem:[#allocation5 + $0x58] sm:$0xff]
    %v642 = vld [vmem:[#allocation5 + $0x60] sm:$0xff]
    %v643 = vld [vmem:[#allocation5 + $0x68] sm:$0xff]
    %v644 = vld [vmem:[#allocation5 + $0x70] sm:$0xff]
    %v645 = vld [vmem:[#allocation5 + $0x78] sm:$0xff]
    %646 = vmatprep.subr.mxu0 0.0
    %647 = vmatpush1.msra.mxu0 %v630
    %648 = vmatprep.subr.mxu0 0.0
    %649 = vmatpush1.msra.mxu0 %v631
    %650 = vmatprep.subr.mxu0 0.0
    %651 = vmatpush1.msra.mxu0 %v632
    %652 = vmatprep.subr.mxu0 0.0
    %653 = vmatpush1.msra.mxu0 %v633
    %654 = vmatprep.subr.mxu0 0.0
    %655 = vmatpush1.msra.mxu0 %v634
    %656 = vmatprep.subr.mxu0 0.0
    %657 = vmatpush1.msra.mxu0 %v635
    %658 = vmatprep.subr.mxu0 0.0
    %659 = vmatpush1.msra.mxu0 %v636
    %660 = vmatprep.subr.mxu0 0.0
    %661 = vmatpush1.msra.mxu0 %v637
    %662 = vmatprep.subr.mxu0 0.0
    %663 = vmatpush1.msra.mxu0 %v638
    %664 = vmatprep.subr.mxu0 0.0
    %665 = vmatpush1.msra.mxu0 %v639
    %666 = vmatprep.subr.mxu0 0.0
    %667 = vmatpush1.msra.mxu0 %v640
    %668 = vmatprep.subr.mxu0 0.0
    %669 = vmatpush1.msra.mxu0 %v641
    %670 = vmatprep.subr.mxu0 0.0
    %671 = vmatpush1.msra.mxu0 %v642
    %672 = vmatprep.subr.mxu0 0.0
    %673 = vmatpush1.msra.mxu0 %v643
    %674 = vmatprep.subr.mxu0 0.0
    %675 = vmatpush1.msra.mxu0 %v644
    %676 = vmatprep.subr.mxu0 0.0
    %677 = vmatpush1.msra.mxu0 %v645
    %678 = vmatprep.subr.mxu0 0.0
    %679 = vmatpush1.msra.mxu0 0.0
    %680 = vmatprep.subr.mxu0 0.0
    %681 = vmatpush1.msra.mxu0 0.0
    %682 = vmatprep.subr.mxu0 0.0
    %683 = vmatpush1.msra.mxu0 0.0
    %684 = vmatprep.subr.mxu0 0.0
    %685 = vmatpush1.msra.mxu0 0.0
    %686 = vmatprep.subr.mxu0 0.0
    %687 = vmatpush1.msra.mxu0 0.0
    %688 = vmatprep.subr.mxu0 0.0
    %689 = vmatpush1.msra.mxu0 0.0
    %690 = vmatprep.subr.mxu0 0.0
    %691 = vmatpush1.msra.mxu0 0.0
    %692 = vmatprep.subr.mxu0 0.0
    %693 = vmatpush1.msra.mxu0 0.0
    %694 = vmatprep.subr.mxu0 0.0
    %695 = vmatpush1.msra.mxu0 0.0
    %696 = vmatprep.subr.mxu0 0.0
    %697 = vmatpush1.msra.mxu0 0.0
    %698 = vmatprep.subr.mxu0 0.0
    %699 = vmatpush1.msra.mxu0 0.0
    %700 = vmatprep.subr.mxu0 0.0
    %701 = vmatpush1.msra.mxu0 0.0
    %702 = vmatprep.subr.mxu0 0.0
    %703 = vmatpush1.msra.mxu0 0.0
    %704 = vmatprep.subr.mxu0 0.0
    %705 = vmatpush1.msra.mxu0 0.0
    %706 = vmatprep.subr.mxu0 0.0
    %707 = vmatpush1.msra.mxu0 0.0
    %708 = vmatprep.subr.mxu0 0.0
    %709 = vmatpush1.msra.mxu0 0.0
    %710 = vmatprep.mubr.f32.mxu0 0.0
    %711 = vmatmul.mubr.f32.gmra.mrb[0].mxu0 %v629
    %v712 = vpop.f32.mrb[0].mxu0
    %v713 = vadd.f32 0.0, %v712
    %v714 = vpop.f32.mrb[0].mxu0
    %715 = vdwg.mxu0
    %v716 = vmul.f32 %v713, 0.001953125
    %v717 = vmul.f32 %v716, %v716
    %v719 = vrot.slane %v717, 7
    %v721 = vsub.f32 %v716, %v719
    %v722 = vld [vmem:[%s2] sm:$0x1]
    %v723 = vadd.f32 %v721, 1e-05
    %v724 = vrsqrt.pop %v723
    %v727 = vunpack.c.l.s4 1966171168
    %v728 = vunpack.c.0.s8 %v727
    %v729 = vlaneseq
    %v730 = vshrl.u32 %v729, 7
    %v731 = vsub.s32 %v728, %v730
    %v732 = vrot.slane %v724, %v731
    %v733 = vcombine.high %v732, %v732
    %v735 = vunpack.c.l.s4 1966171168
    %v736 = vunpack.c.0.s8 %v735
    %v737 = vlaneseq
    %v738 = vshrl.u32 %v737, 7
    %v739 = vsub.s32 %v736, %v738
    %v740 = vrot.slane %v733, %v739
    %v742 = vmul.f32 %v722, %v740
    %v743 = vld [vmem:[%s3] sm:$0x1]
    %v744 = vmul.f32 %v716, %v742
    %v745 = vsub.f32 %v743, %v744
    %v746 = vld [vmem:[#allocation7] sm:$0xff]
    %v747 = vld [vmem:[#allocation7 + $0x8] sm:$0xff]
    %v749 = vlaneseq
    %v750 = vshrl.u32 %v749, 7
    %v751 = vsub.s32 0, %v750
    %v752 = vrot.slane %v742, %v751
    %v754 = vmul.f32 %v746, %v752
    %v755 = vmul.f32 %v747, %v752
    %v757 = vlaneseq
    %v758 = vshrl.u32 %v757, 7
    %v759 = vsub.s32 0, %v758
    %v760 = vrot.slane %v745, %v759
    %v762 = vadd.f32 %v754, %v760
    %v763 = vadd.f32 %v755, %v760
    %v764 = vmax.f32 %v762, 0.0
    %v765 = vmax.f32 %v763, 0.0
    %766 = vst [vmem:[#allocation7] sm:$0xff] %v764
    %767 = vst [vmem:[#allocation7 + $0x8] sm:$0xff] %v765
    %v768 = vld [vmem:[%s607] sm:$0xff]
    %v769 = vld [vmem:[%s607 + $0x8] sm:$0xff]
    %v770 = vmul.f32 %v768, %v752
    %v771 = vmul.f32 %v769, %v752
    %v772 = vadd.f32 %v770, %v760
    %v773 = vadd.f32 %v771, %v760
    %v774 = vmax.f32 %v772, 0.0
    %v775 = vmax.f32 %v773, 0.0
    %776 = vst [vmem:[%s607] sm:$0xff] %v774
    %777 = vst [vmem:[%s607 + $0x8] sm:$0xff] %v775
    // Predicated region
    $region30: #{tpu_custom_call.1} parent=1 // pred_check
      _
    $region31: #{tpu_custom_call.1} parent=1 // pred_check_branch
      %779 = sbr.rel (0) target = $region33
    $region32: #{tpu_custom_call.1} parent=1 // pred_region
      %s781 = ssub.s32 512, 512
      %782 = vsyncadd [#allocation4], %s781
      %s783 = sshll.u32 [#allocation7], 4
      %s784 = int_to_ptr.vmem [resolvable:$true] %s783
      %789 = dma.vmem_to_hbm [thread:$0]  %s784, 512, %s5, [#allocation4], 128, 128, 8
    $region33: #{tpu_custom_call.1} parent=1 // pred_fallthru
      _
    // Predicated region
    $region34: #{tpu_custom_call.1} parent=1 // pred_check
      _
    $region35: #{tpu_custom_call.1} parent=1 // pred_check_branch
      %791 = sbr.rel (0) target = $region37
    $region36: #{tpu_custom_call.1} parent=1 // pred_region
      %792 = dma.done [#allocation4], 512
    $region37: #{tpu_custom_call.1} parent=1 // pred_fallthru
      _
    %793 = vsyncpa [#allocation3], 1
    %794 = vsyncpa [#allocation6], 1
    %795 = vsyncpa [#allocation4], 1

</llo_original>
